<compile_context>
chip_gen: v7x
topology: tpu7x:2x2x1
jax: 0.10.0
libtpu: 0.0.40
codegen_flags: <defaults>
</compile_context>

<pallas_src>
import functools

import jax
import jax.numpy as jnp
from jax.experimental import pallas as pl
from jax.experimental.pallas import tpu as pltpu


def _round_up(n, m):
    return ((n + m - 1) // m) * m


def _pad_to(a, target_shape):
    """Zero-pad `a` up to `target_shape` (each dim >= a.shape[d])."""
    widths = [(0, t - s) for s, t in zip(a.shape, target_shape)]
    if all(w == (0, 0) for w in widths):
        return a
    return jnp.pad(a, widths)


def _ae_kernel(x_ref,
               w1_ref, b1_ref,
               w2_ref, b2_ref,
               w3_ref, b3_ref,
               w4_ref, b4_ref,
               out_ref):
    """Fused autoencoder forward for one (batch_tile, D) tile.

    x / weights are bf16; every matmul accumulates in f32 on the MXU;
    bias-add + ReLU run in f32, intermediates are re-cast to bf16 only as
    MXU operands.
    """
    x = x_ref[...]                                            # bf16 (bt, D)

    # ----- encoder -----
    h1 = jnp.dot(x, w1_ref[...],
                 preferred_element_type=jnp.float32) + b1_ref[...]
    h1 = jnp.maximum(h1, 0.0).astype(jnp.bfloat16)            # ReLU
    z = jnp.dot(h1, w2_ref[...],
                preferred_element_type=jnp.float32) + b2_ref[...]
    z = z.astype(jnp.bfloat16)                                # latent

    # ----- decoder -----
    h2 = jnp.dot(z, w3_ref[...],
                 preferred_element_type=jnp.float32) + b3_ref[...]
    h2 = jnp.maximum(h2, 0.0).astype(jnp.bfloat16)            # ReLU
    rec = jnp.dot(h2, w4_ref[...],
                  preferred_element_type=jnp.float32) + b4_ref[...]

    out_ref[...] = rec.astype(out_ref.dtype)                  # f32 out


@functools.partial(jax.jit, static_argnames=("batch_tile",))
def autoencoder_forward(x, params, *, batch_tile=256):
    """x: (B, D_in) float32.  Returns float32 reconstruction (B, D_in)."""
    (w1, b1), (w2, b2), (w3, b3), (w4, b4) = params
    B, D_in = x.shape
    H = w1.shape[1]
    L = w2.shape[1]

    # Lane-align feature dims (last dim multiples of 128) -- exact zero padding.
    D_p = _round_up(D_in, 128)          # 784 -> 896
    H_p = _round_up(H, 128)             # 128 -> 128
    L_p = _round_up(L, 128)             # 32  -> 128

    # Batch tiling: tile is a multiple of 8 sublanes, batch padded to the tile.
    bt = min(batch_tile, _round_up(B, 8))
    B_p = _round_up(B, bt)

    bf16 = jnp.bfloat16
    x_p = _pad_to(x, (B_p, D_p)).astype(bf16)

    w1p = _pad_to(w1, (D_p, H_p)).astype(bf16)
    w2p = _pad_to(w2, (H_p, L_p)).astype(bf16)
    w3p = _pad_to(w3, (L_p, H_p)).astype(bf16)
    w4p = _pad_to(w4, (H_p, D_p)).astype(bf16)

    # Biases as f32 (1, N) rows so they broadcast over the batch tile.
    b1p = _pad_to(b1, (H_p,)).reshape(1, H_p).astype(jnp.float32)
    b2p = _pad_to(b2, (L_p,)).reshape(1, L_p).astype(jnp.float32)
    b3p = _pad_to(b3, (H_p,)).reshape(1, H_p).astype(jnp.float32)
    b4p = _pad_to(b4, (D_p,)).reshape(1, D_p).astype(jnp.float32)

    # Weights/biases: constant index_map -> resident across grid steps.
    resident = lambda shape: pl.BlockSpec(shape, lambda i: (0, 0))

    out_p = pl.pallas_call(
        _ae_kernel,
        out_shape=jax.ShapeDtypeStruct((B_p, D_p), jnp.float32),
        grid=(B_p // bt,),
        in_specs=[
            pl.BlockSpec((bt, D_p), lambda i: (i, 0)),   # x tile (streamed)
            resident((D_p, H_p)), resident((1, H_p)),    # encoder Linear 1
            resident((H_p, L_p)), resident((1, L_p)),    # encoder Linear 2
            resident((L_p, H_p)), resident((1, H_p)),    # decoder Linear 1
            resident((H_p, D_p)), resident((1, D_p)),    # decoder Linear 2
        ],
        out_specs=pl.BlockSpec((bt, D_p), lambda i: (i, 0)),
        compiler_params=pltpu.CompilerParams(
            dimension_semantics=("parallel",),           # megacore on v7x
        ),
    )(x_p, w1p, b1p, w2p, b2p, w3p, b3p, w4p, b4p)

    # Strip batch / lane padding.
    return out_p[:B, :D_in]


def init_params(key, d_in, hidden, latent, dtype=jnp.float32):
    """PyTorch-style U[-1/sqrt(fan_in), 1/sqrt(fan_in)] init.
    Weights stored (in_features, out_features) so forward is x @ W + b
    (equivalent to PyTorch's x @ W.T with W (out, in))."""
    def linear(k, fan_in, fan_out):
        kw, kb = jax.random.split(k)
        bound = 1.0 / jnp.sqrt(jnp.asarray(fan_in, dtype))
        w = jax.random.uniform(kw, (fan_in, fan_out), dtype, -bound, bound)
        b = jax.random.uniform(kb, (fan_out,), dtype, -bound, bound)
        return w, b

    k1, k2, k3, k4 = jax.random.split(key, 4)
    return (
        linear(k1, d_in, hidden),    # encoder Linear 1
        linear(k2, hidden, latent),  # encoder Linear 2
        linear(k3, latent, hidden),  # decoder Linear 1
        linear(k4, hidden, d_in),    # decoder Linear 2
    )


def reference_forward(x, params):
    """Pure-JAX reference mirroring the kernel's numerics
    (bf16 operands, f32 accumulation / bias / ReLU)."""
    (w1, b1), (w2, b2), (w3, b3), (w4, b4) = params
    bf16 = jnp.bfloat16
    xq = x.astype(bf16)
    h1 = jnp.maximum(
        jnp.dot(xq, w1.astype(bf16), preferred_element_type=jnp.float32) + b1,
        0.0).astype(bf16)
    z = (jnp.dot(h1, w2.astype(bf16), preferred_element_type=jnp.float32)
         + b2).astype(bf16)
    h2 = jnp.maximum(
        jnp.dot(z, w3.astype(bf16), preferred_element_type=jnp.float32) + b3,
        0.0).astype(bf16)
    return jnp.dot(h2, w4.astype(bf16),
                   preferred_element_type=jnp.float32) + b4


if __name__ == "__main__":
    # Small deterministic example: 16 flattened 28x28 "images".
    B, D_IN, HIDDEN, LATENT = 16, 784, 128, 32

    key = jax.random.PRNGKey(0)
    k_params, k_x = jax.random.split(key)

    params = init_params(k_params, D_IN, HIDDEN, LATENT)
    x = jax.random.uniform(k_x, (B, D_IN), jnp.float32)  # pixels in [0, 1)

    out = autoencoder_forward(x, params, batch_tile=256)
    out = jax.block_until_ready(out)

    ref = reference_forward(x, params)
    assert out.shape == (B, D_IN)
    assert jnp.allclose(out, ref, atol=2e-2, rtol=2e-2), "mismatch vs reference"

    # TODO(synk): training_step / validation_step / Adam optimizer /
    # getReconstructions are host-side training utilities, not part of
    # forward(); they are intentionally not ported.
    print("KERNEL_OK")
</pallas_src>

<mosaic_0001>
module attributes {stable_mosaic.version = 11 : i64} {
  func.func @_ae_kernel(%arg0: i32, %arg1: memref<16x896xbf16, #tpu.memory_space<vmem>>, %arg2: memref<896x128xbf16, #tpu.memory_space<vmem>>, %arg3: memref<1x128xf32, #tpu.memory_space<vmem>>, %arg4: memref<128x128xbf16, #tpu.memory_space<vmem>>, %arg5: memref<1x128xf32, #tpu.memory_space<vmem>>, %arg6: memref<128x128xbf16, #tpu.memory_space<vmem>>, %arg7: memref<1x128xf32, #tpu.memory_space<vmem>>, %arg8: memref<128x896xbf16, #tpu.memory_space<vmem>>, %arg9: memref<1x896xf32, #tpu.memory_space<vmem>>, %arg10: memref<16x896xf32, #tpu.memory_space<vmem>>) attributes {dimension_semantics = [#tpu.dimension_semantics<parallel>], iteration_bounds = array<i64: 1>, scalar_prefetch = 0 : i64, scratch_operands = 0 : i64, tpu.core_type = #tpu.core_type<tc>, window_params = [{transform_indices = @transform_0, window_bounds = array<i64: 16, 896>}, {pipeline_mode = #tpu.pipeline_mode<synchronous>, transform_indices = @transform_1, window_bounds = array<i64: 896, 128>}, {pipeline_mode = #tpu.pipeline_mode<synchronous>, transform_indices = @transform_2, window_bounds = array<i64: 1, 128>}, {pipeline_mode = #tpu.pipeline_mode<synchronous>, transform_indices = @transform_3, window_bounds = array<i64: 128, 128>}, {pipeline_mode = #tpu.pipeline_mode<synchronous>, transform_indices = @transform_4, window_bounds = array<i64: 1, 128>}, {pipeline_mode = #tpu.pipeline_mode<synchronous>, transform_indices = @transform_5, window_bounds = array<i64: 128, 128>}, {pipeline_mode = #tpu.pipeline_mode<synchronous>, transform_indices = @transform_6, window_bounds = array<i64: 1, 128>}, {pipeline_mode = #tpu.pipeline_mode<synchronous>, transform_indices = @transform_7, window_bounds = array<i64: 128, 896>}, {pipeline_mode = #tpu.pipeline_mode<synchronous>, transform_indices = @transform_8, window_bounds = array<i64: 1, 896>}, {transform_indices = @transform_9, window_bounds = array<i64: 16, 896>}]} {
    %c0 = arith.constant 0 : index
    %c0_0 = arith.constant 0 : index
    %0 = vector.load %arg1[%c0, %c0_0] : memref<16x896xbf16, #tpu.memory_space<vmem>>, vector<16x896xbf16>
    %c0_1 = arith.constant 0 : index
    %c0_2 = arith.constant 0 : index
    %1 = vector.load %arg2[%c0_1, %c0_2] : memref<896x128xbf16, #tpu.memory_space<vmem>>, vector<896x128xbf16>
    %cst = arith.constant dense<0.000000e+00> : vector<16x128xf32>
    %2 = tpu.matmul %0, %1, %cst {dimension_numbers = #tpu.dot_dimension_numbers<[1], [0], [0], [1], [0, 0, 1, 1], [], []>} : vector<16x896xbf16>, vector<896x128xbf16>, vector<16x128xf32> -> vector<16x128xf32>
    %c0_3 = arith.constant 0 : index
    %c0_4 = arith.constant 0 : index
    %3 = vector.load %arg3[%c0_3, %c0_4] : memref<1x128xf32, #tpu.memory_space<vmem>>, vector<1x128xf32>
    %4 = vector.broadcast %3 : vector<1x128xf32> to vector<16x128xf32>
    %5 = arith.addf %2, %4 : vector<16x128xf32>
    %cst_5 = arith.constant 0.000000e+00 : f32
    %6 = vector.broadcast %cst_5 : f32 to vector<16x128xf32>
    %7 = arith.maximumf %5, %6 : vector<16x128xf32>
    %8 = arith.truncf %7 : vector<16x128xf32> to vector<16x128xbf16>
    %c0_6 = arith.constant 0 : index
    %c0_7 = arith.constant 0 : index
    %9 = vector.load %arg4[%c0_6, %c0_7] : memref<128x128xbf16, #tpu.memory_space<vmem>>, vector<128x128xbf16>
    %cst_8 = arith.constant dense<0.000000e+00> : vector<16x128xf32>
    %10 = tpu.matmul %8, %9, %cst_8 {dimension_numbers = #tpu.dot_dimension_numbers<[1], [0], [0], [1], [0, 0, 1, 1], [], []>} : vector<16x128xbf16>, vector<128x128xbf16>, vector<16x128xf32> -> vector<16x128xf32>
    %c0_9 = arith.constant 0 : index
    %c0_10 = arith.constant 0 : index
    %11 = vector.load %arg5[%c0_9, %c0_10] : memref<1x128xf32, #tpu.memory_space<vmem>>, vector<1x128xf32>
    %12 = vector.broadcast %11 : vector<1x128xf32> to vector<16x128xf32>
    %13 = arith.addf %10, %12 : vector<16x128xf32>
    %14 = arith.truncf %13 : vector<16x128xf32> to vector<16x128xbf16>
    %c0_11 = arith.constant 0 : index
    %c0_12 = arith.constant 0 : index
    %15 = vector.load %arg6[%c0_11, %c0_12] : memref<128x128xbf16, #tpu.memory_space<vmem>>, vector<128x128xbf16>
    %cst_13 = arith.constant dense<0.000000e+00> : vector<16x128xf32>
    %16 = tpu.matmul %14, %15, %cst_13 {dimension_numbers = #tpu.dot_dimension_numbers<[1], [0], [0], [1], [0, 0, 1, 1], [], []>} : vector<16x128xbf16>, vector<128x128xbf16>, vector<16x128xf32> -> vector<16x128xf32>
    %c0_14 = arith.constant 0 : index
    %c0_15 = arith.constant 0 : index
    %17 = vector.load %arg7[%c0_14, %c0_15] : memref<1x128xf32, #tpu.memory_space<vmem>>, vector<1x128xf32>
    %18 = vector.broadcast %17 : vector<1x128xf32> to vector<16x128xf32>
    %19 = arith.addf %16, %18 : vector<16x128xf32>
    %cst_16 = arith.constant 0.000000e+00 : f32
    %20 = vector.broadcast %cst_16 : f32 to vector<16x128xf32>
    %21 = arith.maximumf %19, %20 : vector<16x128xf32>
    %22 = arith.truncf %21 : vector<16x128xf32> to vector<16x128xbf16>
    %c0_17 = arith.constant 0 : index
    %c0_18 = arith.constant 0 : index
    %23 = vector.load %arg8[%c0_17, %c0_18] : memref<128x896xbf16, #tpu.memory_space<vmem>>, vector<128x896xbf16>
    %cst_19 = arith.constant dense<0.000000e+00> : vector<16x896xf32>
    %24 = tpu.matmul %22, %23, %cst_19 {dimension_numbers = #tpu.dot_dimension_numbers<[1], [0], [0], [1], [0, 0, 1, 1], [], []>} : vector<16x128xbf16>, vector<128x896xbf16>, vector<16x896xf32> -> vector<16x896xf32>
    %c0_20 = arith.constant 0 : index
    %c0_21 = arith.constant 0 : index
    %25 = vector.load %arg9[%c0_20, %c0_21] : memref<1x896xf32, #tpu.memory_space<vmem>>, vector<1x896xf32>
    %26 = vector.broadcast %25 : vector<1x896xf32> to vector<16x896xf32>
    %27 = arith.addf %24, %26 : vector<16x896xf32>
    %c0_22 = arith.constant 0 : index
    %c0_23 = arith.constant 0 : index
    %28 = vector.load %arg10[%c0_22, %c0_23] : memref<16x896xf32, #tpu.memory_space<vmem>>, vector<16x896xf32>
    tpu.vector_store %arg10[%c0_22, %c0_23], %27 {strides = array<i32>} : memref<16x896xf32, #tpu.memory_space<vmem>>, vector<16x896xf32>,
    return
  }
  func.func @transform_0(%arg0: i32) -> (i32, i32) {
    %c0_i32 = arith.constant 0 : i32
    %c0_i32_0 = arith.constant 0 : i32
    return %arg0, %c0_i32 : i32, i32
  }
  func.func @transform_1(%arg0: i32) -> (i32, i32) {
    %c0_i32 = arith.constant 0 : i32
    %c0_i32_0 = arith.constant 0 : i32
    %c0_i32_1 = arith.constant 0 : i32
    return %c0_i32, %c0_i32_0 : i32, i32
  }
  func.func @transform_2(%arg0: i32) -> (i32, i32) {
    %c0_i32 = arith.constant 0 : i32
    %c0_i32_0 = arith.constant 0 : i32
    %c0_i32_1 = arith.constant 0 : i32
    return %c0_i32, %c0_i32_0 : i32, i32
  }
  func.func @transform_3(%arg0: i32) -> (i32, i32) {
    %c0_i32 = arith.constant 0 : i32
    %c0_i32_0 = arith.constant 0 : i32
    %c0_i32_1 = arith.constant 0 : i32
    return %c0_i32, %c0_i32_0 : i32, i32
  }
  func.func @transform_4(%arg0: i32) -> (i32, i32) {
    %c0_i32 = arith.constant 0 : i32
    %c0_i32_0 = arith.constant 0 : i32
    %c0_i32_1 = arith.constant 0 : i32
    return %c0_i32, %c0_i32_0 : i32, i32
  }
  func.func @transform_5(%arg0: i32) -> (i32, i32) {
    %c0_i32 = arith.constant 0 : i32
    %c0_i32_0 = arith.constant 0 : i32
    %c0_i32_1 = arith.constant 0 : i32
    return %c0_i32, %c0_i32_0 : i32, i32
  }
  func.func @transform_6(%arg0: i32) -> (i32, i32) {
    %c0_i32 = arith.constant 0 : i32
    %c0_i32_0 = arith.constant 0 : i32
    %c0_i32_1 = arith.constant 0 : i32
    return %c0_i32, %c0_i32_0 : i32, i32
  }
  func.func @transform_7(%arg0: i32) -> (i32, i32) {
    %c0_i32 = arith.constant 0 : i32
    %c0_i32_0 = arith.constant 0 : i32
    %c0_i32_1 = arith.constant 0 : i32
    return %c0_i32, %c0_i32_0 : i32, i32
  }
  func.func @transform_8(%arg0: i32) -> (i32, i32) {
    %c0_i32 = arith.constant 0 : i32
    %c0_i32_0 = arith.constant 0 : i32
    %c0_i32_1 = arith.constant 0 : i32
    return %c0_i32, %c0_i32_0 : i32, i32
  }
  func.func @transform_9(%arg0: i32) -> (i32, i32) {
    %c0_i32 = arith.constant 0 : i32
    %c0_i32_0 = arith.constant 0 : i32
    return %arg0, %c0_i32 : i32, i32
  }
}

</mosaic_0001>

<llo_original>
// kernel: autoencoder_forward.1
$region0: #{autoencoder_forward.1}
  #allocation0 [shape = 'u32[]', space=smem, size = 0x4, offset = 0x4, fixed_abs, tag = 'smem constant byte address 0x4 - core index']
  #allocation1 [shape = 'u32[144,128]{1,0:T(1,128)}', space=vmem, size = 0x12000, scoped, tag = 'internal scratch']
  %s0 = inlined_call_operand.vmem [shape: bf16[16,896], index: 0, kind: input, shape index: {}]
  %s1 = inlined_call_operand.vmem [shape: bf16[896,128], index: 1, kind: input, shape index: {}]
  %s2 = inlined_call_operand.vmem [shape: f32[1,128], index: 2, kind: input, shape index: {}]
  %s3 = inlined_call_operand.vmem [shape: bf16[128,128], index: 3, kind: input, shape index: {}]
  %s4 = inlined_call_operand.vmem [shape: f32[1,128], index: 4, kind: input, shape index: {}]
  %s5 = inlined_call_operand.vmem [shape: bf16[128,128], index: 5, kind: input, shape index: {}]
  %s6 = inlined_call_operand.vmem [shape: f32[1,128], index: 6, kind: input, shape index: {}]
  %s7 = inlined_call_operand.vmem [shape: bf16[128,896], index: 7, kind: input, shape index: {}]
  %s8 = inlined_call_operand.vmem [shape: f32[1,896], index: 8, kind: input, shape index: {}]
  %s9 = inlined_call_operand.hbm [shape: f32[16,896], index: 9, kind: output, shape index: {}]
  %s10 = sld [smem:[#allocation0]]
  $region46: #{autoencoder_forward.1} parent=0
    _
  %s12 = ssub.s32 1, %s10
  %s13 = scalar_select 0, %s12, %s10
  $region1: #{autoencoder_forward.1} parent=0
    #allocation2 [shape = 'u8[57344]{0}', space=vmem, size = 0xe000, scoped, tag = 'output window, operand 0, single buffered']
    #allocation3 [shape = 's32[1]{0}', space=sflag, size = 0x4, scoped, tag = 'scoped memory for autoencoder_forward.1']
    %14 = vsyncpa [#allocation3], 0
    // Predicated region
    $region2: #{autoencoder_forward.1} parent=1 // pred_check
      _
    $region3: #{autoencoder_forward.1} parent=1 // pred_check_branch
      %16 = sbr.rel (0) target = $region5
    $region4: #{autoencoder_forward.1} parent=1 // pred_region
      _
    $region5: #{autoencoder_forward.1} parent=1 // pred_fallthru
      _
    // Predicated region
    $region6: #{autoencoder_forward.1} parent=1 // pred_check
      _
    $region7: #{autoencoder_forward.1} parent=1 // pred_check_branch
      %18 = sbr.rel (0) target = $region9
    $region8: #{autoencoder_forward.1} parent=1 // pred_region
      _
    $region9: #{autoencoder_forward.1} parent=1 // pred_fallthru
      _
    // Predicated region
    $region10: #{autoencoder_forward.1} parent=1 // pred_check
      _
    $region11: #{autoencoder_forward.1} parent=1 // pred_check_branch
      %20 = sbr.rel (0) target = $region13
    $region12: #{autoencoder_forward.1} parent=1 // pred_region
      _
    $region13: #{autoencoder_forward.1} parent=1 // pred_fallthru
      _
    // Predicated region
    $region14: #{autoencoder_forward.1} parent=1 // pred_check
      _
    $region15: #{autoencoder_forward.1} parent=1 // pred_check_branch
      %22 = sbr.rel (0) target = $region17
    $region16: #{autoencoder_forward.1} parent=1 // pred_region
      _
    $region17: #{autoencoder_forward.1} parent=1 // pred_fallthru
      _
    // Predicated region
    $region18: #{autoencoder_forward.1} parent=1 // pred_check
      _
    $region19: #{autoencoder_forward.1} parent=1 // pred_check_branch
      %24 = sbr.rel (0) target = $region21
    $region20: #{autoencoder_forward.1} parent=1 // pred_region
      _
    $region21: #{autoencoder_forward.1} parent=1 // pred_fallthru
      _
    // Predicated region
    $region22: #{autoencoder_forward.1} parent=1 // pred_check
      _
    $region23: #{autoencoder_forward.1} parent=1 // pred_check_branch
      %26 = sbr.rel (0) target = $region25
    $region24: #{autoencoder_forward.1} parent=1 // pred_region
      _
    $region25: #{autoencoder_forward.1} parent=1 // pred_fallthru
      _
    // Predicated region
    $region26: #{autoencoder_forward.1} parent=1 // pred_check
      _
    $region27: #{autoencoder_forward.1} parent=1 // pred_check_branch
      %28 = sbr.rel (0) target = $region29
    $region28: #{autoencoder_forward.1} parent=1 // pred_region
      _
    $region29: #{autoencoder_forward.1} parent=1 // pred_fallthru
      _
    // Predicated region
    $region30: #{autoencoder_forward.1} parent=1 // pred_check
      _
    $region31: #{autoencoder_forward.1} parent=1 // pred_check_branch
      %30 = sbr.rel (0) target = $region33
    $region32: #{autoencoder_forward.1} parent=1 // pred_region
      _
    $region33: #{autoencoder_forward.1} parent=1 // pred_fallthru
      _
    // Predicated region
    $region34: #{autoencoder_forward.1} parent=1 // pred_check
      _
    $region35: #{autoencoder_forward.1} parent=1 // pred_check_branch
      %32 = sbr.rel (0) target = $region37
    $region36: #{autoencoder_forward.1} parent=1 // pred_region
      _
    $region37: #{autoencoder_forward.1} parent=1 // pred_fallthru
      _
    %v34 = vld [vmem:[%s0] sm:$0xff]
    %v35 = vld [vmem:[%s0 + $0x8] sm:$0xff]
    %v36 = vld [vmem:[%s0 + $0x10] sm:$0xff]
    %v37 = vld [vmem:[%s0 + $0x18] sm:$0xf]
    %v38 = vld [vmem:[%s0 + $0x1c] sm:$0xff]
    %v39 = vld [vmem:[%s0 + $0x24] sm:$0xff]
    %v40 = vld [vmem:[%s0 + $0x2c] sm:$0xff]
    %v41 = vld [vmem:[%s0 + $0x34] sm:$0xf]
    %v42 = vld [vmem:[%s1] sm:$0xf]
    %v43 = vld [vmem:[%s1 + $0x4] sm:$0xf]
    %v44 = vld [vmem:[%s1 + $0x8] sm:$0xf]
    %v45 = vld [vmem:[%s1 + $0xc] sm:$0xf]
    %v46 = vld [vmem:[%s1 + $0x10] sm:$0xf]
    %v47 = vld [vmem:[%s1 + $0x14] sm:$0xf]
    %v48 = vld [vmem:[%s1 + $0x18] sm:$0xf]
    %v49 = vld [vmem:[%s1 + $0x1c] sm:$0xf]
    %v50 = vld [vmem:[%s1 + $0x20] sm:$0xf]
    %v51 = vld [vmem:[%s1 + $0x24] sm:$0xf]
    %v52 = vld [vmem:[%s1 + $0x28] sm:$0xf]
    %v53 = vld [vmem:[%s1 + $0x2c] sm:$0xf]
    %v54 = vld [vmem:[%s1 + $0x30] sm:$0xf]
    %v55 = vld [vmem:[%s1 + $0x34] sm:$0xf]
    %v56 = vld [vmem:[%s1 + $0x38] sm:$0xf]
    %v57 = vld [vmem:[%s1 + $0x3c] sm:$0xf]
    %v58 = vld [vmem:[%s1 + $0x40] sm:$0xf]
    %v59 = vld [vmem:[%s1 + $0x44] sm:$0xf]
    %v60 = vld [vmem:[%s1 + $0x48] sm:$0xf]
    %v61 = vld [vmem:[%s1 + $0x4c] sm:$0xf]
    %v62 = vld [vmem:[%s1 + $0x50] sm:$0xf]
    %v63 = vld [vmem:[%s1 + $0x54] sm:$0xf]
    %v64 = vld [vmem:[%s1 + $0x58] sm:$0xf]
    %v65 = vld [vmem:[%s1 + $0x5c] sm:$0xf]
    %v66 = vld [vmem:[%s1 + $0x60] sm:$0xf]
    %v67 = vld [vmem:[%s1 + $0x64] sm:$0xf]
    %v68 = vld [vmem:[%s1 + $0x68] sm:$0xf]
    %v69 = vld [vmem:[%s1 + $0x6c] sm:$0xf]
    %v70 = vld [vmem:[%s1 + $0x70] sm:$0xf]
    %v71 = vld [vmem:[%s1 + $0x74] sm:$0xf]
    %v72 = vld [vmem:[%s1 + $0x78] sm:$0xf]
    %v73 = vld [vmem:[%s1 + $0x7c] sm:$0xf]
    %v74 = vld [vmem:[%s1 + $0x80] sm:$0xf]
    %v75 = vld [vmem:[%s1 + $0x84] sm:$0xf]
    %v76 = vld [vmem:[%s1 + $0x88] sm:$0xf]
    %v77 = vld [vmem:[%s1 + $0x8c] sm:$0xf]
    %v78 = vld [vmem:[%s1 + $0x90] sm:$0xf]
    %v79 = vld [vmem:[%s1 + $0x94] sm:$0xf]
    %v80 = vld [vmem:[%s1 + $0x98] sm:$0xf]
    %v81 = vld [vmem:[%s1 + $0x9c] sm:$0xf]
    %v82 = vld [vmem:[%s1 + $0xa0] sm:$0xf]
    %v83 = vld [vmem:[%s1 + $0xa4] sm:$0xf]
    %v84 = vld [vmem:[%s1 + $0xa8] sm:$0xf]
    %v85 = vld [vmem:[%s1 + $0xac] sm:$0xf]
    %v86 = vld [vmem:[%s1 + $0xb0] sm:$0xf]
    %v87 = vld [vmem:[%s1 + $0xb4] sm:$0xf]
    %v88 = vld [vmem:[%s1 + $0xb8] sm:$0xf]
    %v89 = vld [vmem:[%s1 + $0xbc] sm:$0xf]
    %v90 = vld [vmem:[%s1 + $0xc0] sm:$0xf]
    %v91 = vld [vmem:[%s1 + $0xc4] sm:$0xf]
    %v92 = vld [vmem:[%s1 + $0xc8] sm:$0xf]
    %v93 = vld [vmem:[%s1 + $0xcc] sm:$0xf]
    %v94 = vld [vmem:[%s1 + $0xd0] sm:$0xf]
    %v95 = vld [vmem:[%s1 + $0xd4] sm:$0xf]
    %v96 = vld [vmem:[%s1 + $0xd8] sm:$0xf]
    %v97 = vld [vmem:[%s1 + $0xdc] sm:$0xf]
    %v98 = vld [vmem:[%s1 + $0xe0] sm:$0xf]
    %v99 = vld [vmem:[%s1 + $0xe4] sm:$0xf]
    %v100 = vld [vmem:[%s1 + $0xe8] sm:$0xf]
    %v101 = vld [vmem:[%s1 + $0xec] sm:$0xf]
    %v102 = vld [vmem:[%s1 + $0xf0] sm:$0xf]
    %v103 = vld [vmem:[%s1 + $0xf4] sm:$0xf]
    %v104 = vld [vmem:[%s1 + $0xf8] sm:$0xf]
    %v105 = vld [vmem:[%s1 + $0xfc] sm:$0xf]
    %v106 = vld [vmem:[%s1 + $0x100] sm:$0xf]
    %v107 = vld [vmem:[%s1 + $0x104] sm:$0xf]
    %v108 = vld [vmem:[%s1 + $0x108] sm:$0xf]
    %v109 = vld [vmem:[%s1 + $0x10c] sm:$0xf]
    %v110 = vld [vmem:[%s1 + $0x110] sm:$0xf]
    %v111 = vld [vmem:[%s1 + $0x114] sm:$0xf]
    %v112 = vld [vmem:[%s1 + $0x118] sm:$0xf]
    %v113 = vld [vmem:[%s1 + $0x11c] sm:$0xf]
    %v114 = vld [vmem:[%s1 + $0x120] sm:$0xf]
    %v115 = vld [vmem:[%s1 + $0x124] sm:$0xf]
    %v116 = vld [vmem:[%s1 + $0x128] sm:$0xf]
    %v117 = vld [vmem:[%s1 + $0x12c] sm:$0xf]
    %v118 = vld [vmem:[%s1 + $0x130] sm:$0xf]
    %v119 = vld [vmem:[%s1 + $0x134] sm:$0xf]
    %v120 = vld [vmem:[%s1 + $0x138] sm:$0xf]
    %v121 = vld [vmem:[%s1 + $0x13c] sm:$0xf]
    %v122 = vld [vmem:[%s1 + $0x140] sm:$0xf]
    %v123 = vld [vmem:[%s1 + $0x144] sm:$0xf]
    %v124 = vld [vmem:[%s1 + $0x148] sm:$0xf]
    %v125 = vld [vmem:[%s1 + $0x14c] sm:$0xf]
    %v126 = vld [vmem:[%s1 + $0x150] sm:$0xf]
    %v127 = vld [vmem:[%s1 + $0x154] sm:$0xf]
    %v128 = vld [vmem:[%s1 + $0x158] sm:$0xf]
    %v129 = vld [vmem:[%s1 + $0x15c] sm:$0xf]
    %v130 = vld [vmem:[%s1 + $0x160] sm:$0xf]
    %v131 = vld [vmem:[%s1 + $0x164] sm:$0xf]
    %v132 = vld [vmem:[%s1 + $0x168] sm:$0xf]
    %v133 = vld [vmem:[%s1 + $0x16c] sm:$0xf]
    %v134 = vld [vmem:[%s1 + $0x170] sm:$0xf]
    %v135 = vld [vmem:[%s1 + $0x174] sm:$0xf]
    %v136 = vld [vmem:[%s1 + $0x178] sm:$0xf]
    %v137 = vld [vmem:[%s1 + $0x17c] sm:$0xf]
    %v138 = vld [vmem:[%s1 + $0x180] sm:$0xf]
    %v139 = vld [vmem:[%s1 + $0x184] sm:$0xf]
    %v140 = vld [vmem:[%s1 + $0x188] sm:$0xf]
    %v141 = vld [vmem:[%s1 + $0x18c] sm:$0xf]
    %v142 = vld [vmem:[%s1 + $0x190] sm:$0xf]
    %v143 = vld [vmem:[%s1 + $0x194] sm:$0xf]
    %v144 = vld [vmem:[%s1 + $0x198] sm:$0xf]
    %v145 = vld [vmem:[%s1 + $0x19c] sm:$0xf]
    %v146 = vld [vmem:[%s1 + $0x1a0] sm:$0xf]
    %v147 = vld [vmem:[%s1 + $0x1a4] sm:$0xf]
    %v148 = vld [vmem:[%s1 + $0x1a8] sm:$0xf]
    %v149 = vld [vmem:[%s1 + $0x1ac] sm:$0xf]
    %v150 = vld [vmem:[%s1 + $0x1b0] sm:$0xf]
    %v151 = vld [vmem:[%s1 + $0x1b4] sm:$0xf]
    %v152 = vld [vmem:[%s1 + $0x1b8] sm:$0xf]
    %v153 = vld [vmem:[%s1 + $0x1bc] sm:$0xf]
    %v154 = vld [vmem:[%s2] sm:$0x1]
    %v156 = vlaneseq
    %v157 = vshrl.u32 %v156, 7
    %v158 = vsub.s32 0, %v157
    %v159 = vrot.slane %v154, %v158
    %v169 = vunpack.c.l.b16 %v34
    %v170 = vunpack.c.h.b16 %v34
    %v171 = vunpack.c.l.b16 %v35
    %v172 = vunpack.c.h.b16 %v35
    %v173 = vunpack.c.l.b16 %v36
    %v174 = vunpack.c.h.b16 %v36
    %v175 = vunpack.c.l.b16 %v37
    %v176 = vunpack.c.l.b16 %v38
    %v177 = vunpack.c.h.b16 %v38
    %v178 = vunpack.c.l.b16 %v39
    %v179 = vunpack.c.h.b16 %v39
    %v180 = vunpack.c.l.b16 %v40
    %v181 = vunpack.c.h.b16 %v40
    %v182 = vunpack.c.l.b16 %v41
    %v183 = vpack.c.b16 %v176, %v169
    %v184 = vpack.c.b16 %v177, %v170
    %v185 = vpack.c.b16 %v178, %v171
    %v186 = vpack.c.b16 %v179, %v172
    %v187 = vpack.c.b16 %v180, %v173
    %v188 = vpack.c.b16 %v181, %v174
    %v189 = vpack.c.b16 %v182, %v175
    %v309 = vunpack.c.l.b16 %v42
    %v310 = vunpack.c.l.b16 %v43
    %v311 = vunpack.c.l.b16 %v44
    %v312 = vunpack.c.l.b16 %v45
    %v313 = vunpack.c.l.b16 %v46
    %v314 = vunpack.c.l.b16 %v47
    %v315 = vunpack.c.l.b16 %v48
    %v316 = vunpack.c.l.b16 %v49
    %v317 = vunpack.c.l.b16 %v50
    %v318 = vunpack.c.l.b16 %v51
    %v319 = vunpack.c.l.b16 %v52
    %v320 = vunpack.c.l.b16 %v53
    %v321 = vunpack.c.l.b16 %v54
    %v322 = vunpack.c.l.b16 %v55
    %v323 = vunpack.c.l.b16 %v56
    %v324 = vunpack.c.l.b16 %v57
    %v325 = vunpack.c.l.b16 %v58
    %v326 = vunpack.c.l.b16 %v59
    %v327 = vunpack.c.l.b16 %v60
    %v328 = vunpack.c.l.b16 %v61
    %v329 = vunpack.c.l.b16 %v62
    %v330 = vunpack.c.l.b16 %v63
    %v331 = vunpack.c.l.b16 %v64
    %v332 = vunpack.c.l.b16 %v65
    %v333 = vunpack.c.l.b16 %v66
    %v334 = vunpack.c.l.b16 %v67
    %v335 = vunpack.c.l.b16 %v68
    %v336 = vunpack.c.l.b16 %v69
    %v337 = vunpack.c.l.b16 %v70
    %v338 = vunpack.c.l.b16 %v71
    %v339 = vunpack.c.l.b16 %v72
    %v340 = vunpack.c.l.b16 %v73
    %v341 = vunpack.c.l.b16 %v74
    %v342 = vunpack.c.l.b16 %v75
    %v343 = vunpack.c.l.b16 %v76
    %v344 = vunpack.c.l.b16 %v77
    %v345 = vunpack.c.l.b16 %v78
    %v346 = vunpack.c.l.b16 %v79
    %v347 = vunpack.c.l.b16 %v80
    %v348 = vunpack.c.l.b16 %v81
    %v349 = vunpack.c.l.b16 %v82
    %v350 = vunpack.c.l.b16 %v83
    %v351 = vunpack.c.l.b16 %v84
    %v352 = vunpack.c.l.b16 %v85
    %v353 = vunpack.c.l.b16 %v86
    %v354 = vunpack.c.l.b16 %v87
    %v355 = vunpack.c.l.b16 %v88
    %v356 = vunpack.c.l.b16 %v89
    %v357 = vunpack.c.l.b16 %v90
    %v358 = vunpack.c.l.b16 %v91
    %v359 = vunpack.c.l.b16 %v92
    %v360 = vunpack.c.l.b16 %v93
    %v361 = vunpack.c.l.b16 %v94
    %v362 = vunpack.c.l.b16 %v95
    %v363 = vunpack.c.l.b16 %v96
    %v364 = vunpack.c.l.b16 %v97
    %v365 = vunpack.c.l.b16 %v98
    %v366 = vunpack.c.l.b16 %v99
    %v367 = vunpack.c.l.b16 %v100
    %v368 = vunpack.c.l.b16 %v101
    %v369 = vunpack.c.l.b16 %v102
    %v370 = vunpack.c.l.b16 %v103
    %v371 = vunpack.c.l.b16 %v104
    %v372 = vunpack.c.l.b16 %v105
    %v373 = vunpack.c.l.b16 %v106
    %v374 = vunpack.c.l.b16 %v107
    %v375 = vunpack.c.l.b16 %v108
    %v376 = vunpack.c.l.b16 %v109
    %v377 = vunpack.c.l.b16 %v110
    %v378 = vunpack.c.l.b16 %v111
    %v379 = vunpack.c.l.b16 %v112
    %v380 = vunpack.c.l.b16 %v113
    %v381 = vunpack.c.l.b16 %v114
    %v382 = vunpack.c.l.b16 %v115
    %v383 = vunpack.c.l.b16 %v116
    %v384 = vunpack.c.l.b16 %v117
    %v385 = vunpack.c.l.b16 %v118
    %v386 = vunpack.c.l.b16 %v119
    %v387 = vunpack.c.l.b16 %v120
    %v388 = vunpack.c.l.b16 %v121
    %v389 = vunpack.c.l.b16 %v122
    %v390 = vunpack.c.l.b16 %v123
    %v391 = vunpack.c.l.b16 %v124
    %v392 = vunpack.c.l.b16 %v125
    %v393 = vunpack.c.l.b16 %v126
    %v394 = vunpack.c.l.b16 %v127
    %v395 = vunpack.c.l.b16 %v128
    %v396 = vunpack.c.l.b16 %v129
    %v397 = vunpack.c.l.b16 %v130
    %v398 = vunpack.c.l.b16 %v131
    %v399 = vunpack.c.l.b16 %v132
    %v400 = vunpack.c.l.b16 %v133
    %v401 = vunpack.c.l.b16 %v134
    %v402 = vunpack.c.l.b16 %v135
    %v403 = vunpack.c.l.b16 %v136
    %v404 = vunpack.c.l.b16 %v137
    %v405 = vunpack.c.l.b16 %v138
    %v406 = vunpack.c.l.b16 %v139
    %v407 = vunpack.c.l.b16 %v140
    %v408 = vunpack.c.l.b16 %v141
    %v409 = vunpack.c.l.b16 %v142
    %v410 = vunpack.c.l.b16 %v143
    %v411 = vunpack.c.l.b16 %v144
    %v412 = vunpack.c.l.b16 %v145
    %v413 = vunpack.c.l.b16 %v146
    %v414 = vunpack.c.l.b16 %v147
    %v415 = vunpack.c.l.b16 %v148
    %v416 = vunpack.c.l.b16 %v149
    %v417 = vunpack.c.l.b16 %v150
    %v418 = vunpack.c.l.b16 %v151
    %v419 = vunpack.c.l.b16 %v152
    %v420 = vunpack.c.l.b16 %v153
    %v421 = vpack.c.b16 %v310, %v309
    %v422 = vpack.c.b16 %v312, %v311
    %v423 = vpack.c.b16 %v314, %v313
    %v424 = vpack.c.b16 %v316, %v315
    %v425 = vpack.c.b16 %v318, %v317
    %v426 = vpack.c.b16 %v320, %v319
    %v427 = vpack.c.b16 %v322, %v321
    %v428 = vpack.c.b16 %v324, %v323
    %v429 = vpack.c.b16 %v326, %v325
    %v430 = vpack.c.b16 %v328, %v327
    %v431 = vpack.c.b16 %v330, %v329
    %v432 = vpack.c.b16 %v332, %v331
    %v433 = vpack.c.b16 %v334, %v333
    %v434 = vpack.c.b16 %v336, %v335
    %v435 = vpack.c.b16 %v338, %v337
    %v436 = vpack.c.b16 %v340, %v339
    %v437 = vpack.c.b16 %v342, %v341
    %v438 = vpack.c.b16 %v344, %v343
    %v439 = vpack.c.b16 %v346, %v345
    %v440 = vpack.c.b16 %v348, %v347
    %v441 = vpack.c.b16 %v350, %v349
    %v442 = vpack.c.b16 %v352, %v351
    %v443 = vpack.c.b16 %v354, %v353
    %v444 = vpack.c.b16 %v356, %v355
    %v445 = vpack.c.b16 %v358, %v357
    %v446 = vpack.c.b16 %v360, %v359
    %v447 = vpack.c.b16 %v362, %v361
    %v448 = vpack.c.b16 %v364, %v363
    %v449 = vpack.c.b16 %v366, %v365
    %v450 = vpack.c.b16 %v368, %v367
    %v451 = vpack.c.b16 %v370, %v369
    %v452 = vpack.c.b16 %v372, %v371
    %v453 = vpack.c.b16 %v374, %v373
    %v454 = vpack.c.b16 %v376, %v375
    %v455 = vpack.c.b16 %v378, %v377
    %v456 = vpack.c.b16 %v380, %v379
    %v457 = vpack.c.b16 %v382, %v381
    %v458 = vpack.c.b16 %v384, %v383
    %v459 = vpack.c.b16 %v386, %v385
    %v460 = vpack.c.b16 %v388, %v387
    %v461 = vpack.c.b16 %v390, %v389
    %v462 = vpack.c.b16 %v392, %v391
    %v463 = vpack.c.b16 %v394, %v393
    %v464 = vpack.c.b16 %v396, %v395
    %v465 = vpack.c.b16 %v398, %v397
    %v466 = vpack.c.b16 %v400, %v399
    %v467 = vpack.c.b16 %v402, %v401
    %v468 = vpack.c.b16 %v404, %v403
    %v469 = vpack.c.b16 %v406, %v405
    %v470 = vpack.c.b16 %v408, %v407
    %v471 = vpack.c.b16 %v410, %v409
    %v472 = vpack.c.b16 %v412, %v411
    %v473 = vpack.c.b16 %v414, %v413
    %v474 = vpack.c.b16 %v416, %v415
    %v475 = vpack.c.b16 %v418, %v417
    %v476 = vpack.c.b16 %v420, %v419
    %533 = vmatprep.subr.bf16.mxu0 0
    %534 = vmatpush1.bf16.msra.mxu0 %v421
    %535 = vmatprep.subr.bf16.mxu0 0
    %536 = vmatpush1.bf16.msra.mxu0 %v422
    %537 = vmatprep.subr.bf16.mxu0 0
    %538 = vmatpush1.bf16.msra.mxu0 %v423
    %539 = vmatprep.subr.bf16.mxu0 0
    %540 = vmatpush1.bf16.msra.mxu0 %v424
    %541 = vmatprep.subr.bf16.mxu0 0
    %542 = vmatpush1.bf16.msra.mxu0 %v425
    %543 = vmatprep.subr.bf16.mxu0 0
    %544 = vmatpush1.bf16.msra.mxu0 %v426
    %545 = vmatprep.subr.bf16.mxu0 0
    %546 = vmatpush1.bf16.msra.mxu0 %v427
    %547 = vmatprep.subr.bf16.mxu0 0
    %548 = vmatpush1.bf16.msra.mxu0 %v428
    %549 = vmatprep.subr.bf16.mxu0 0
    %550 = vmatpush1.bf16.msra.mxu0 %v429
    %551 = vmatprep.subr.bf16.mxu0 0
    %552 = vmatpush1.bf16.msra.mxu0 %v430
    %553 = vmatprep.subr.bf16.mxu0 0
    %554 = vmatpush1.bf16.msra.mxu0 %v431
    %555 = vmatprep.subr.bf16.mxu0 0
    %556 = vmatpush1.bf16.msra.mxu0 %v432
    %557 = vmatprep.subr.bf16.mxu0 0
    %558 = vmatpush1.bf16.msra.mxu0 %v433
    %559 = vmatprep.subr.bf16.mxu0 0
    %560 = vmatpush1.bf16.msra.mxu0 %v434
    %561 = vmatprep.subr.bf16.mxu0 0
    %562 = vmatpush1.bf16.msra.mxu0 %v435
    %563 = vmatprep.subr.bf16.mxu0 0
    %564 = vmatpush1.bf16.msra.mxu0 %v436
    %565 = vmatprep.mubr.bf16.mxu0 %v184
    %566 = vmatmul.mubr.bf16.gmra.mrb[0].mxu0 %v183
    %v567 = vpop.f32.mrb[0].mxu0
    %v568 = vadd.f32 %v159, %v567
    %v569 = vpop.f32.mrb[0].mxu0
    %v570 = vpop.f32.mrb[0].mxu0
    %v571 = vadd.f32 %v159, %v570
    %v572 = vpop.f32.mrb[0].mxu0
    %573 = vdwg.mxu0
    %574 = vmatprep.subr.bf16.mxu0 0
    %575 = vmatpush1.bf16.msra.mxu0 %v437
    %576 = vmatprep.subr.bf16.mxu0 0
    %577 = vmatpush1.bf16.msra.mxu0 %v438
    %578 = vmatprep.subr.bf16.mxu0 0
    %579 = vmatpush1.bf16.msra.mxu0 %v439
    %580 = vmatprep.subr.bf16.mxu0 0
    %581 = vmatpush1.bf16.msra.mxu0 %v440
    %582 = vmatprep.subr.bf16.mxu0 0
    %583 = vmatpush1.bf16.msra.mxu0 %v441
    %584 = vmatprep.subr.bf16.mxu0 0
    %585 = vmatpush1.bf16.msra.mxu0 %v442
    %586 = vmatprep.subr.bf16.mxu0 0
    %587 = vmatpush1.bf16.msra.mxu0 %v443
    %588 = vmatprep.subr.bf16.mxu0 0
    %589 = vmatpush1.bf16.msra.mxu0 %v444
    %590 = vmatprep.subr.bf16.mxu0 0
    %591 = vmatpush1.bf16.msra.mxu0 %v445
    %592 = vmatprep.subr.bf16.mxu0 0
    %593 = vmatpush1.bf16.msra.mxu0 %v446
    %594 = vmatprep.subr.bf16.mxu0 0
    %595 = vmatpush1.bf16.msra.mxu0 %v447
    %596 = vmatprep.subr.bf16.mxu0 0
    %597 = vmatpush1.bf16.msra.mxu0 %v448
    %598 = vmatprep.subr.bf16.mxu0 0
    %599 = vmatpush1.bf16.msra.mxu0 %v449
    %600 = vmatprep.subr.bf16.mxu0 0
    %601 = vmatpush1.bf16.msra.mxu0 %v450
    %602 = vmatprep.subr.bf16.mxu0 0
    %603 = vmatpush1.bf16.msra.mxu0 %v451
    %604 = vmatprep.subr.bf16.mxu0 0
    %605 = vmatpush1.bf16.msra.mxu0 %v452
    %606 = vmatprep.mubr.bf16.mxu0 %v186
    %607 = vmatmul.mubr.bf16.gmra.mrb[0].mxu0 %v185
    %v608 = vpop.f32.mrb[0].mxu0
    %v609 = vadd.f32 %v568, %v608
    %v610 = vpop.f32.mrb[0].mxu0
    %v611 = vpop.f32.mrb[0].mxu0
    %v612 = vadd.f32 %v571, %v611
    %v613 = vpop.f32.mrb[0].mxu0
    %614 = vdwg.mxu0
    %615 = vmatprep.subr.bf16.mxu0 0
    %616 = vmatpush1.bf16.msra.mxu0 %v453
    %617 = vmatprep.subr.bf16.mxu0 0
    %618 = vmatpush1.bf16.msra.mxu0 %v454
    %619 = vmatprep.subr.bf16.mxu0 0
    %620 = vmatpush1.bf16.msra.mxu0 %v455
    %621 = vmatprep.subr.bf16.mxu0 0
    %622 = vmatpush1.bf16.msra.mxu0 %v456
    %623 = vmatprep.subr.bf16.mxu0 0
    %624 = vmatpush1.bf16.msra.mxu0 %v457
    %625 = vmatprep.subr.bf16.mxu0 0
    %626 = vmatpush1.bf16.msra.mxu0 %v458
    %627 = vmatprep.subr.bf16.mxu0 0
    %628 = vmatpush1.bf16.msra.mxu0 %v459
    %629 = vmatprep.subr.bf16.mxu0 0
    %630 = vmatpush1.bf16.msra.mxu0 %v460
    %631 = vmatprep.subr.bf16.mxu0 0
    %632 = vmatpush1.bf16.msra.mxu0 %v461
    %633 = vmatprep.subr.bf16.mxu0 0
    %634 = vmatpush1.bf16.msra.mxu0 %v462
    %635 = vmatprep.subr.bf16.mxu0 0
    %636 = vmatpush1.bf16.msra.mxu0 %v463
    %637 = vmatprep.subr.bf16.mxu0 0
    %638 = vmatpush1.bf16.msra.mxu0 %v464
    %639 = vmatprep.subr.bf16.mxu0 0
    %640 = vmatpush1.bf16.msra.mxu0 %v465
    %641 = vmatprep.subr.bf16.mxu0 0
    %642 = vmatpush1.bf16.msra.mxu0 %v466
    %643 = vmatprep.subr.bf16.mxu0 0
    %644 = vmatpush1.bf16.msra.mxu0 %v467
    %645 = vmatprep.subr.bf16.mxu0 0
    %646 = vmatpush1.bf16.msra.mxu0 %v468
    %647 = vmatprep.mubr.bf16.mxu0 %v188
    %648 = vmatmul.mubr.bf16.gmra.mrb[0].mxu0 %v187
    %v649 = vpop.f32.mrb[0].mxu0
    %v650 = vadd.f32 %v609, %v649
    %v651 = vpop.f32.mrb[0].mxu0
    %v652 = vpop.f32.mrb[0].mxu0
    %v653 = vadd.f32 %v612, %v652
    %v654 = vpop.f32.mrb[0].mxu0
    %655 = vdwg.mxu0
    %656 = vmatprep.subr.bf16.mxu0 0
    %657 = vmatpush1.bf16.msra.mxu0 %v469
    %658 = vmatprep.subr.bf16.mxu0 0
    %659 = vmatpush1.bf16.msra.mxu0 %v470
    %660 = vmatprep.subr.bf16.mxu0 0
    %661 = vmatpush1.bf16.msra.mxu0 %v471
    %662 = vmatprep.subr.bf16.mxu0 0
    %663 = vmatpush1.bf16.msra.mxu0 %v472
    %664 = vmatprep.subr.bf16.mxu0 0
    %665 = vmatpush1.bf16.msra.mxu0 %v473
    %666 = vmatprep.subr.bf16.mxu0 0
    %667 = vmatpush1.bf16.msra.mxu0 %v474
    %668 = vmatprep.subr.bf16.mxu0 0
    %669 = vmatpush1.bf16.msra.mxu0 %v475
    %670 = vmatprep.subr.bf16.mxu0 0
    %671 = vmatpush1.bf16.msra.mxu0 %v476
    %672 = vmatprep.subr.bf16.mxu0 0
    %673 = vmatpush1.bf16.msra.mxu0 0
    %674 = vmatprep.subr.bf16.mxu0 0
    %675 = vmatpush1.bf16.msra.mxu0 0
    %676 = vmatprep.subr.bf16.mxu0 0
    %677 = vmatpush1.bf16.msra.mxu0 0
    %678 = vmatprep.subr.bf16.mxu0 0
    %679 = vmatpush1.bf16.msra.mxu0 0
    %680 = vmatprep.subr.bf16.mxu0 0
    %681 = vmatpush1.bf16.msra.mxu0 0
    %682 = vmatprep.subr.bf16.mxu0 0
    %683 = vmatpush1.bf16.msra.mxu0 0
    %684 = vmatprep.subr.bf16.mxu0 0
    %685 = vmatpush1.bf16.msra.mxu0 0
    %686 = vmatprep.subr.bf16.mxu0 0
    %687 = vmatpush1.bf16.msra.mxu0 0
    %688 = vmatprep.mubr.bf16.mxu0 0
    %689 = vmatmul.mubr.bf16.gmra.mrb[0].mxu0 %v189
    %v690 = vpop.f32.mrb[0].mxu0
    %v691 = vadd.f32 %v650, %v690
    %v692 = vpop.f32.mrb[0].mxu0
    %v693 = vpop.f32.mrb[0].mxu0
    %v694 = vadd.f32 %v653, %v693
    %v695 = vpop.f32.mrb[0].mxu0
    %696 = vdwg.mxu0
    %v697 = vmax.f32 %v691, 0.0
    %v698 = vmax.f32 %v694, 0.0
    %v699 = vpack.c.bf16 %v698, %v697
    %v700 = vld [vmem:[%s3] sm:$0xf]
    %v701 = vld [vmem:[%s3 + $0x4] sm:$0xf]
    %v702 = vld [vmem:[%s3 + $0x8] sm:$0xf]
    %v703 = vld [vmem:[%s3 + $0xc] sm:$0xf]
    %v704 = vld [vmem:[%s3 + $0x10] sm:$0xf]
    %v705 = vld [vmem:[%s3 + $0x14] sm:$0xf]
    %v706 = vld [vmem:[%s3 + $0x18] sm:$0xf]
    %v707 = vld [vmem:[%s3 + $0x1c] sm:$0xf]
    %v708 = vld [vmem:[%s3 + $0x20] sm:$0xf]
    %v709 = vld [vmem:[%s3 + $0x24] sm:$0xf]
    %v710 = vld [vmem:[%s3 + $0x28] sm:$0xf]
    %v711 = vld [vmem:[%s3 + $0x2c] sm:$0xf]
    %v712 = vld [vmem:[%s3 + $0x30] sm:$0xf]
    %v713 = vld [vmem:[%s3 + $0x34] sm:$0xf]
    %v714 = vld [vmem:[%s3 + $0x38] sm:$0xf]
    %v715 = vld [vmem:[%s3 + $0x3c] sm:$0xf]
    %v716 = vld [vmem:[%s4] sm:$0x1]
    %v718 = vlaneseq
    %v719 = vshrl.u32 %v718, 7
    %v720 = vsub.s32 0, %v719
    %v721 = vrot.slane %v716, %v720
    %v739 = vunpack.c.l.b16 %v700
    %v740 = vunpack.c.l.b16 %v701
    %v741 = vunpack.c.l.b16 %v702
    %v742 = vunpack.c.l.b16 %v703
    %v743 = vunpack.c.l.b16 %v704
    %v744 = vunpack.c.l.b16 %v705
    %v745 = vunpack.c.l.b16 %v706
    %v746 = vunpack.c.l.b16 %v707
    %v747 = vunpack.c.l.b16 %v708
    %v748 = vunpack.c.l.b16 %v709
    %v749 = vunpack.c.l.b16 %v710
    %v750 = vunpack.c.l.b16 %v711
    %v751 = vunpack.c.l.b16 %v712
    %v752 = vunpack.c.l.b16 %v713
    %v753 = vunpack.c.l.b16 %v714
    %v754 = vunpack.c.l.b16 %v715
    %v755 = vpack.c.b16 %v740, %v739
    %v756 = vpack.c.b16 %v742, %v741
    %v757 = vpack.c.b16 %v744, %v743
    %v758 = vpack.c.b16 %v746, %v745
    %v759 = vpack.c.b16 %v748, %v747
    %v760 = vpack.c.b16 %v750, %v749
    %v761 = vpack.c.b16 %v752, %v751
    %v762 = vpack.c.b16 %v754, %v753
    %771 = vmatprep.subr.bf16.mxu0 0
    %772 = vmatpush1.bf16.msra.mxu0 %v755
    %773 = vmatprep.subr.bf16.mxu0 0
    %774 = vmatpush1.bf16.msra.mxu0 %v756
    %775 = vmatprep.subr.bf16.mxu0 0
    %776 = vmatpush1.bf16.msra.mxu0 %v757
    %777 = vmatprep.subr.bf16.mxu0 0
    %778 = vmatpush1.bf16.msra.mxu0 %v758
    %779 = vmatprep.subr.bf16.mxu0 0
    %780 = vmatpush1.bf16.msra.mxu0 %v759
    %781 = vmatprep.subr.bf16.mxu0 0
    %782 = vmatpush1.bf16.msra.mxu0 %v760
    %783 = vmatprep.subr.bf16.mxu0 0
    %784 = vmatpush1.bf16.msra.mxu0 %v761
    %785 = vmatprep.subr.bf16.mxu0 0
    %786 = vmatpush1.bf16.msra.mxu0 %v762
    %787 = vmatprep.subr.bf16.mxu0 0
    %788 = vmatpush1.bf16.msra.mxu0 0
    %789 = vmatprep.subr.bf16.mxu0 0
    %790 = vmatpush1.bf16.msra.mxu0 0
    %791 = vmatprep.subr.bf16.mxu0 0
    %792 = vmatpush1.bf16.msra.mxu0 0
    %793 = vmatprep.subr.bf16.mxu0 0
    %794 = vmatpush1.bf16.msra.mxu0 0
    %795 = vmatprep.subr.bf16.mxu0 0
    %796 = vmatpush1.bf16.msra.mxu0 0
    %797 = vmatprep.subr.bf16.mxu0 0
    %798 = vmatpush1.bf16.msra.mxu0 0
    %799 = vmatprep.subr.bf16.mxu0 0
    %800 = vmatpush1.bf16.msra.mxu0 0
    %801 = vmatprep.subr.bf16.mxu0 0
    %802 = vmatpush1.bf16.msra.mxu0 0
    %803 = vmatprep.mubr.bf16.mxu0 0
    %804 = vmatmul.mubr.bf16.gmra.mrb[0].mxu0 %v699
    %v805 = vpop.f32.mrb[0].mxu0
    %v806 = vadd.f32 %v721, %v805
    %v807 = vpop.f32.mrb[0].mxu0
    %v808 = vpop.f32.mrb[0].mxu0
    %v809 = vadd.f32 %v721, %v808
    %v810 = vpop.f32.mrb[0].mxu0
    %811 = vdwg.mxu0
    %v812 = vpack.c.bf16 %v809, %v806
    %v813 = vld [vmem:[%s5] sm:$0xf]
    %v814 = vld [vmem:[%s5 + $0x4] sm:$0xf]
    %v815 = vld [vmem:[%s5 + $0x8] sm:$0xf]
    %v816 = vld [vmem:[%s5 + $0xc] sm:$0xf]
    %v817 = vld [vmem:[%s5 + $0x10] sm:$0xf]
    %v818 = vld [vmem:[%s5 + $0x14] sm:$0xf]
    %v819 = vld [vmem:[%s5 + $0x18] sm:$0xf]
    %v820 = vld [vmem:[%s5 + $0x1c] sm:$0xf]
    %v821 = vld [vmem:[%s5 + $0x20] sm:$0xf]
    %v822 = vld [vmem:[%s5 + $0x24] sm:$0xf]
    %v823 = vld [vmem:[%s5 + $0x28] sm:$0xf]
    %v824 = vld [vmem:[%s5 + $0x2c] sm:$0xf]
    %v825 = vld [vmem:[%s5 + $0x30] sm:$0xf]
    %v826 = vld [vmem:[%s5 + $0x34] sm:$0xf]
    %v827 = vld [vmem:[%s5 + $0x38] sm:$0xf]
    %v828 = vld [vmem:[%s5 + $0x3c] sm:$0xf]
    %v829 = vld [vmem:[%s6] sm:$0x1]
    %v831 = vlaneseq
    %v832 = vshrl.u32 %v831, 7
    %v833 = vsub.s32 0, %v832
    %v834 = vrot.slane %v829, %v833
    %v852 = vunpack.c.l.b16 %v813
    %v853 = vunpack.c.l.b16 %v814
    %v854 = vunpack.c.l.b16 %v815
    %v855 = vunpack.c.l.b16 %v816
    %v856 = vunpack.c.l.b16 %v817
    %v857 = vunpack.c.l.b16 %v818
    %v858 = vunpack.c.l.b16 %v819
    %v859 = vunpack.c.l.b16 %v820
    %v860 = vunpack.c.l.b16 %v821
    %v861 = vunpack.c.l.b16 %v822
    %v862 = vunpack.c.l.b16 %v823
    %v863 = vunpack.c.l.b16 %v824
    %v864 = vunpack.c.l.b16 %v825
    %v865 = vunpack.c.l.b16 %v826
    %v866 = vunpack.c.l.b16 %v827
    %v867 = vunpack.c.l.b16 %v828
    %v868 = vpack.c.b16 %v853, %v852
    %v869 = vpack.c.b16 %v855, %v854
    %v870 = vpack.c.b16 %v857, %v856
    %v871 = vpack.c.b16 %v859, %v858
    %v872 = vpack.c.b16 %v861, %v860
    %v873 = vpack.c.b16 %v863, %v862
    %v874 = vpack.c.b16 %v865, %v864
    %v875 = vpack.c.b16 %v867, %v866
    %884 = vmatprep.subr.bf16.mxu0 0
    %885 = vmatpush1.bf16.msra.mxu0 %v868
    %886 = vmatprep.subr.bf16.mxu0 0
    %887 = vmatpush1.bf16.msra.mxu0 %v869
    %888 = vmatprep.subr.bf16.mxu0 0
    %889 = vmatpush1.bf16.msra.mxu0 %v870
    %890 = vmatprep.subr.bf16.mxu0 0
    %891 = vmatpush1.bf16.msra.mxu0 %v871
    %892 = vmatprep.subr.bf16.mxu0 0
    %893 = vmatpush1.bf16.msra.mxu0 %v872
    %894 = vmatprep.subr.bf16.mxu0 0
    %895 = vmatpush1.bf16.msra.mxu0 %v873
    %896 = vmatprep.subr.bf16.mxu0 0
    %897 = vmatpush1.bf16.msra.mxu0 %v874
    %898 = vmatprep.subr.bf16.mxu0 0
    %899 = vmatpush1.bf16.msra.mxu0 %v875
    %900 = vmatprep.subr.bf16.mxu0 0
    %901 = vmatpush1.bf16.msra.mxu0 0
    %902 = vmatprep.subr.bf16.mxu0 0
    %903 = vmatpush1.bf16.msra.mxu0 0
    %904 = vmatprep.subr.bf16.mxu0 0
    %905 = vmatpush1.bf16.msra.mxu0 0
    %906 = vmatprep.subr.bf16.mxu0 0
    %907 = vmatpush1.bf16.msra.mxu0 0
    %908 = vmatprep.subr.bf16.mxu0 0
    %909 = vmatpush1.bf16.msra.mxu0 0
    %910 = vmatprep.subr.bf16.mxu0 0
    %911 = vmatpush1.bf16.msra.mxu0 0
    %912 = vmatprep.subr.bf16.mxu0 0
    %913 = vmatpush1.bf16.msra.mxu0 0
    %914 = vmatprep.subr.bf16.mxu0 0
    %915 = vmatpush1.bf16.msra.mxu0 0
    %916 = vmatprep.mubr.bf16.mxu0 0
    %917 = vmatmul.mubr.bf16.gmra.mrb[0].mxu0 %v812
    %v918 = vpop.f32.mrb[0].mxu0
    %v919 = vadd.f32 %v834, %v918
    %v920 = vpop.f32.mrb[0].mxu0
    %v921 = vpop.f32.mrb[0].mxu0
    %v922 = vadd.f32 %v834, %v921
    %v923 = vpop.f32.mrb[0].mxu0
    %924 = vdwg.mxu0
    %v925 = vmax.f32 %v919, 0.0
    %v926 = vmax.f32 %v922, 0.0
    %v927 = vpack.c.bf16 %v926, %v925
    %v928 = vld [vmem:[%s7] sm:$0xff]
    %v929 = vld [vmem:[%s7 + $0x8] sm:$0xff]
    %v930 = vld [vmem:[%s7 + $0x10] sm:$0xff]
    %v931 = vld [vmem:[%s7 + $0x18] sm:$0xf]
    %v932 = vld [vmem:[%s7 + $0x1c] sm:$0xff]
    %v933 = vld [vmem:[%s7 + $0x24] sm:$0xff]
    %v934 = vld [vmem:[%s7 + $0x2c] sm:$0xff]
    %v935 = vld [vmem:[%s7 + $0x34] sm:$0xf]
    %v936 = vld [vmem:[%s7 + $0x38] sm:$0xff]
    %v937 = vld [vmem:[%s7 + $0x40] sm:$0xff]
    %v938 = vld [vmem:[%s7 + $0x48] sm:$0xff]
    %v939 = vld [vmem:[%s7 + $0x50] sm:$0xf]
    %v940 = vld [vmem:[%s7 + $0x54] sm:$0xff]
    %v941 = vld [vmem:[%s7 + $0x5c] sm:$0xff]
    %v942 = vld [vmem:[%s7 + $0x64] sm:$0xff]
    %v943 = vld [vmem:[%s7 + $0x6c] sm:$0xf]
    %v944 = vld [vmem:[%s7 + $0x70] sm:$0xff]
    %v945 = vld [vmem:[%s7 + $0x78] sm:$0xff]
    %v946 = vld [vmem:[%s7 + $0x80] sm:$0xff]
    %v947 = vld [vmem:[%s7 + $0x88] sm:$0xf]
    %v948 = vld [vmem:[%s7 + $0x8c] sm:$0xff]
    %v949 = vld [vmem:[%s7 + $0x94] sm:$0xff]
    %v950 = vld [vmem:[%s7 + $0x9c] sm:$0xff]
    %v951 = vld [vmem:[%s7 + $0xa4] sm:$0xf]
    %v952 = vld [vmem:[%s7 + $0xa8] sm:$0xff]
    %v953 = vld [vmem:[%s7 + $0xb0] sm:$0xff]
    %v954 = vld [vmem:[%s7 + $0xb8] sm:$0xff]
    %v955 = vld [vmem:[%s7 + $0xc0] sm:$0xf]
    %v956 = vld [vmem:[%s7 + $0xc4] sm:$0xff]
    %v957 = vld [vmem:[%s7 + $0xcc] sm:$0xff]
    %v958 = vld [vmem:[%s7 + $0xd4] sm:$0xff]
    %v959 = vld [vmem:[%s7 + $0xdc] sm:$0xf]
    %v960 = vld [vmem:[%s7 + $0xe0] sm:$0xff]
    %v961 = vld [vmem:[%s7 + $0xe8] sm:$0xff]
    %v962 = vld [vmem:[%s7 + $0xf0] sm:$0xff]
    %v963 = vld [vmem:[%s7 + $0xf8] sm:$0xf]
    %v964 = vld [vmem:[%s7 + $0xfc] sm:$0xff]
    %v965 = vld [vmem:[%s7 + $0x104] sm:$0xff]
    %v966 = vld [vmem:[%s7 + $0x10c] sm:$0xff]
    %v967 = vld [vmem:[%s7 + $0x114] sm:$0xf]
    %v968 = vld [vmem:[%s7 + $0x118] sm:$0xff]
    %v969 = vld [vmem:[%s7 + $0x120] sm:$0xff]
    %v970 = vld [vmem:[%s7 + $0x128] sm:$0xff]
    %v971 = vld [vmem:[%s7 + $0x130] sm:$0xf]
    %v972 = vld [vmem:[%s7 + $0x134] sm:$0xff]
    %v973 = vld [vmem:[%s7 + $0x13c] sm:$0xff]
    %v974 = vld [vmem:[%s7 + $0x144] sm:$0xff]
    %v975 = vld [vmem:[%s7 + $0x14c] sm:$0xf]
    %v976 = vld [vmem:[%s7 + $0x150] sm:$0xff]
    %v977 = vld [vmem:[%s7 + $0x158] sm:$0xff]
    %v978 = vld [vmem:[%s7 + $0x160] sm:$0xff]
    %v979 = vld [vmem:[%s7 + $0x168] sm:$0xf]
    %v980 = vld [vmem:[%s7 + $0x16c] sm:$0xff]
    %v981 = vld [vmem:[%s7 + $0x174] sm:$0xff]
    %v982 = vld [vmem:[%s7 + $0x17c] sm:$0xff]
    %v983 = vld [vmem:[%s7 + $0x184] sm:$0xf]
    %v984 = vld [vmem:[%s7 + $0x188] sm:$0xff]
    %v985 = vld [vmem:[%s7 + $0x190] sm:$0xff]
    %v986 = vld [vmem:[%s7 + $0x198] sm:$0xff]
    %v987 = vld [vmem:[%s7 + $0x1a0] sm:$0xf]
    %v988 = vld [vmem:[%s7 + $0x1a4] sm:$0xff]
    %v989 = vld [vmem:[%s7 + $0x1ac] sm:$0xff]
    %v990 = vld [vmem:[%s7 + $0x1b4] sm:$0xff]
    %v991 = vld [vmem:[%s7 + $0x1bc] sm:$0xf]
    %v992 = vld [vmem:[%s8] sm:$0xff]
    %v994 = vlaneseq
    %v995 = vshrl.u32 %v994, 7
    %v996 = vsub.s32 0, %v995
    %v997 = vrot.slane %v992, %v996
    %v998 = vlaneseq
    %v999 = vshrl.u32 %v998, 7
    %v1000 = vsub.s32 1, %v999
    %v1001 = vrot.slane %v992, %v1000
    %v1002 = vlaneseq
    %v1003 = vshrl.u32 %v1002, 7
    %v1004 = vsub.s32 2, %v1003
    %v1005 = vrot.slane %v992, %v1004
    %v1006 = vlaneseq
    %v1007 = vshrl.u32 %v1006, 7
    %v1008 = vsub.s32 3, %v1007
    %v1009 = vrot.slane %v992, %v1008
    %v1010 = vlaneseq
    %v1011 = vshrl.u32 %v1010, 7
    %v1012 = vsub.s32 4, %v1011
    %v1013 = vrot.slane %v992, %v1012
    %v1014 = vlaneseq
    %v1015 = vshrl.u32 %v1014, 7
    %v1016 = vsub.s32 5, %v1015
    %v1017 = vrot.slane %v992, %v1016
    %v1018 = vlaneseq
    %v1019 = vshrl.u32 %v1018, 7
    %v1020 = vsub.s32 6, %v1019
    %v1021 = vrot.slane %v992, %v1020
    %v1093 = vunpack.c.l.b16 %v928
    %v1094 = vunpack.c.h.b16 %v928
    %v1095 = vunpack.c.l.b16 %v929
    %v1096 = vunpack.c.h.b16 %v929
    %v1097 = vunpack.c.l.b16 %v930
    %v1098 = vunpack.c.h.b16 %v930
    %v1099 = vunpack.c.l.b16 %v931
    %v1100 = vunpack.c.l.b16 %v932
    %v1101 = vunpack.c.h.b16 %v932
    %v1102 = vunpack.c.l.b16 %v933
    %v1103 = vunpack.c.h.b16 %v933
    %v1104 = vunpack.c.l.b16 %v934
    %v1105 = vunpack.c.h.b16 %v934
    %v1106 = vunpack.c.l.b16 %v935
    %v1107 = vunpack.c.l.b16 %v936
    %v1108 = vunpack.c.h.b16 %v936
    %v1109 = vunpack.c.l.b16 %v937
    %v1110 = vunpack.c.h.b16 %v937
    %v1111 = vunpack.c.l.b16 %v938
    %v1112 = vunpack.c.h.b16 %v938
    %v1113 = vunpack.c.l.b16 %v939
    %v1114 = vunpack.c.l.b16 %v940
    %v1115 = vunpack.c.h.b16 %v940
    %v1116 = vunpack.c.l.b16 %v941
    %v1117 = vunpack.c.h.b16 %v941
    %v1118 = vunpack.c.l.b16 %v942
    %v1119 = vunpack.c.h.b16 %v942
    %v1120 = vunpack.c.l.b16 %v943
    %v1121 = vunpack.c.l.b16 %v944
    %v1122 = vunpack.c.h.b16 %v944
    %v1123 = vunpack.c.l.b16 %v945
    %v1124 = vunpack.c.h.b16 %v945
    %v1125 = vunpack.c.l.b16 %v946
    %v1126 = vunpack.c.h.b16 %v946
    %v1127 = vunpack.c.l.b16 %v947
    %v1128 = vunpack.c.l.b16 %v948
    %v1129 = vunpack.c.h.b16 %v948
    %v1130 = vunpack.c.l.b16 %v949
    %v1131 = vunpack.c.h.b16 %v949
    %v1132 = vunpack.c.l.b16 %v950
    %v1133 = vunpack.c.h.b16 %v950
    %v1134 = vunpack.c.l.b16 %v951
    %v1135 = vunpack.c.l.b16 %v952
    %v1136 = vunpack.c.h.b16 %v952
    %v1137 = vunpack.c.l.b16 %v953
    %v1138 = vunpack.c.h.b16 %v953
    %v1139 = vunpack.c.l.b16 %v954
    %v1140 = vunpack.c.h.b16 %v954
    %v1141 = vunpack.c.l.b16 %v955
    %v1142 = vunpack.c.l.b16 %v956
    %v1143 = vunpack.c.h.b16 %v956
    %v1144 = vunpack.c.l.b16 %v957
    %v1145 = vunpack.c.h.b16 %v957
    %v1146 = vunpack.c.l.b16 %v958
    %v1147 = vunpack.c.h.b16 %v958
    %v1148 = vunpack.c.l.b16 %v959
    %v1149 = vunpack.c.l.b16 %v960
    %v1150 = vunpack.c.h.b16 %v960
    %v1151 = vunpack.c.l.b16 %v961
    %v1152 = vunpack.c.h.b16 %v961
    %v1153 = vunpack.c.l.b16 %v962
    %v1154 = vunpack.c.h.b16 %v962
    %v1155 = vunpack.c.l.b16 %v963
    %v1156 = vunpack.c.l.b16 %v964
    %v1157 = vunpack.c.h.b16 %v964
    %v1158 = vunpack.c.l.b16 %v965
    %v1159 = vunpack.c.h.b16 %v965
    %v1160 = vunpack.c.l.b16 %v966
    %v1161 = vunpack.c.h.b16 %v966
    %v1162 = vunpack.c.l.b16 %v967
    %v1163 = vunpack.c.l.b16 %v968
    %v1164 = vunpack.c.h.b16 %v968
    %v1165 = vunpack.c.l.b16 %v969
    %v1166 = vunpack.c.h.b16 %v969
    %v1167 = vunpack.c.l.b16 %v970
    %v1168 = vunpack.c.h.b16 %v970
    %v1169 = vunpack.c.l.b16 %v971
    %v1170 = vunpack.c.l.b16 %v972
    %v1171 = vunpack.c.h.b16 %v972
    %v1172 = vunpack.c.l.b16 %v973
    %v1173 = vunpack.c.h.b16 %v973
    %v1174 = vunpack.c.l.b16 %v974
    %v1175 = vunpack.c.h.b16 %v974
    %v1176 = vunpack.c.l.b16 %v975
    %v1177 = vunpack.c.l.b16 %v976
    %v1178 = vunpack.c.h.b16 %v976
    %v1179 = vunpack.c.l.b16 %v977
    %v1180 = vunpack.c.h.b16 %v977
    %v1181 = vunpack.c.l.b16 %v978
    %v1182 = vunpack.c.h.b16 %v978
    %v1183 = vunpack.c.l.b16 %v979
    %v1184 = vunpack.c.l.b16 %v980
    %v1185 = vunpack.c.h.b16 %v980
    %v1186 = vunpack.c.l.b16 %v981
    %v1187 = vunpack.c.h.b16 %v981
    %v1188 = vunpack.c.l.b16 %v982
    %v1189 = vunpack.c.h.b16 %v982
    %v1190 = vunpack.c.l.b16 %v983
    %v1191 = vunpack.c.l.b16 %v984
    %v1192 = vunpack.c.h.b16 %v984
    %v1193 = vunpack.c.l.b16 %v985
    %v1194 = vunpack.c.h.b16 %v985
    %v1195 = vunpack.c.l.b16 %v986
    %v1196 = vunpack.c.h.b16 %v986
    %v1197 = vunpack.c.l.b16 %v987
    %v1198 = vunpack.c.l.b16 %v988
    %v1199 = vunpack.c.h.b16 %v988
    %v1200 = vunpack.c.l.b16 %v989
    %v1201 = vunpack.c.h.b16 %v989
    %v1202 = vunpack.c.l.b16 %v990
    %v1203 = vunpack.c.h.b16 %v990
    %v1204 = vunpack.c.l.b16 %v991
    %v1205 = vpack.c.b16 %v1100, %v1093
    %v1206 = vpack.c.b16 %v1101, %v1094
    %v1207 = vpack.c.b16 %v1102, %v1095
    %v1208 = vpack.c.b16 %v1103, %v1096
    %v1209 = vpack.c.b16 %v1104, %v1097
    %v1210 = vpack.c.b16 %v1105, %v1098
    %v1211 = vpack.c.b16 %v1106, %v1099
    %v1212 = vpack.c.b16 %v1114, %v1107
    %v1213 = vpack.c.b16 %v1115, %v1108
    %v1214 = vpack.c.b16 %v1116, %v1109
    %v1215 = vpack.c.b16 %v1117, %v1110
    %v1216 = vpack.c.b16 %v1118, %v1111
    %v1217 = vpack.c.b16 %v1119, %v1112
    %v1218 = vpack.c.b16 %v1120, %v1113
    %v1219 = vpack.c.b16 %v1128, %v1121
    %v1220 = vpack.c.b16 %v1129, %v1122
    %v1221 = vpack.c.b16 %v1130, %v1123
    %v1222 = vpack.c.b16 %v1131, %v1124
    %v1223 = vpack.c.b16 %v1132, %v1125
    %v1224 = vpack.c.b16 %v1133, %v1126
    %v1225 = vpack.c.b16 %v1134, %v1127
    %v1226 = vpack.c.b16 %v1142, %v1135
    %v1227 = vpack.c.b16 %v1143, %v1136
    %v1228 = vpack.c.b16 %v1144, %v1137
    %v1229 = vpack.c.b16 %v1145, %v1138
    %v1230 = vpack.c.b16 %v1146, %v1139
    %v1231 = vpack.c.b16 %v1147, %v1140
    %v1232 = vpack.c.b16 %v1148, %v1141
    %v1233 = vpack.c.b16 %v1156, %v1149
    %v1234 = vpack.c.b16 %v1157, %v1150
    %v1235 = vpack.c.b16 %v1158, %v1151
    %v1236 = vpack.c.b16 %v1159, %v1152
    %v1237 = vpack.c.b16 %v1160, %v1153
    %v1238 = vpack.c.b16 %v1161, %v1154
    %v1239 = vpack.c.b16 %v1162, %v1155
    %v1240 = vpack.c.b16 %v1170, %v1163
    %v1241 = vpack.c.b16 %v1171, %v1164
    %v1242 = vpack.c.b16 %v1172, %v1165
    %v1243 = vpack.c.b16 %v1173, %v1166
    %v1244 = vpack.c.b16 %v1174, %v1167
    %v1245 = vpack.c.b16 %v1175, %v1168
    %v1246 = vpack.c.b16 %v1176, %v1169
    %v1247 = vpack.c.b16 %v1184, %v1177
    %v1248 = vpack.c.b16 %v1185, %v1178
    %v1249 = vpack.c.b16 %v1186, %v1179
    %v1250 = vpack.c.b16 %v1187, %v1180
    %v1251 = vpack.c.b16 %v1188, %v1181
    %v1252 = vpack.c.b16 %v1189, %v1182
    %v1253 = vpack.c.b16 %v1190, %v1183
    %v1254 = vpack.c.b16 %v1198, %v1191
    %v1255 = vpack.c.b16 %v1199, %v1192
    %v1256 = vpack.c.b16 %v1200, %v1193
    %v1257 = vpack.c.b16 %v1201, %v1194
    %v1258 = vpack.c.b16 %v1202, %v1195
    %v1259 = vpack.c.b16 %v1203, %v1196
    %v1260 = vpack.c.b16 %v1204, %v1197
    %1317 = vmatprep.subr.bf16.mxu0 %v1206
    %1318 = vmatpush1.bf16.msra.mxu0 %v1205
    %1319 = vmatprep.subr.bf16.mxu0 %v1213
    %1320 = vmatpush1.bf16.msra.mxu0 %v1212
    %1321 = vmatprep.subr.bf16.mxu0 %v1220
    %1322 = vmatpush1.bf16.msra.mxu0 %v1219
    %1323 = vmatprep.subr.bf16.mxu0 %v1227
    %1324 = vmatpush1.bf16.msra.mxu0 %v1226
    %1325 = vmatprep.subr.bf16.mxu0 %v1234
    %1326 = vmatpush1.bf16.msra.mxu0 %v1233
    %1327 = vmatprep.subr.bf16.mxu0 %v1241
    %1328 = vmatpush1.bf16.msra.mxu0 %v1240
    %1329 = vmatprep.subr.bf16.mxu0 %v1248
    %1330 = vmatpush1.bf16.msra.mxu0 %v1247
    %1331 = vmatprep.subr.bf16.mxu0 %v1255
    %1332 = vmatpush1.bf16.msra.mxu0 %v1254
    %1333 = vmatprep.subr.bf16.mxu0 0
    %1334 = vmatpush1.bf16.msra.mxu0 0
    %1335 = vmatprep.subr.bf16.mxu0 0
    %1336 = vmatpush1.bf16.msra.mxu0 0
    %1337 = vmatprep.subr.bf16.mxu0 0
    %1338 = vmatpush1.bf16.msra.mxu0 0
    %1339 = vmatprep.subr.bf16.mxu0 0
    %1340 = vmatpush1.bf16.msra.mxu0 0
    %1341 = vmatprep.subr.bf16.mxu0 0
    %1342 = vmatpush1.bf16.msra.mxu0 0
    %1343 = vmatprep.subr.bf16.mxu0 0
    %1344 = vmatpush1.bf16.msra.mxu0 0
    %1345 = vmatprep.subr.bf16.mxu0 0
    %1346 = vmatpush1.bf16.msra.mxu0 0
    %1347 = vmatprep.subr.bf16.mxu0 0
    %1348 = vmatpush1.bf16.msra.mxu0 0
    %1349 = vmatprep.mubr.bf16.mxu0 0
    %1350 = vmatmul.mubr.bf16.gmra.mrb[0].mxu0 %v927
    %v1351 = vpop.f32.mrb[0].mxu0
    %v1352 = vadd.f32 %v997, %v1351
    %v1353 = vpop.f32.mrb[0].mxu0
    %v1354 = vadd.f32 %v1001, %v1353
    %v1355 = vpop.f32.mrb[0].mxu0
    %v1356 = vadd.f32 %v997, %v1355
    %v1357 = vpop.f32.mrb[0].mxu0
    %v1358 = vadd.f32 %v1001, %v1357
    %1359 = vdwg.mxu0
    %1360 = vmatprep.subr.bf16.mxu0 %v1208
    %1361 = vmatpush1.bf16.msra.mxu0 %v1207
    %1362 = vmatprep.subr.bf16.mxu0 %v1215
    %1363 = vmatpush1.bf16.msra.mxu0 %v1214
    %1364 = vmatprep.subr.bf16.mxu0 %v1222
    %1365 = vmatpush1.bf16.msra.mxu0 %v1221
    %1366 = vmatprep.subr.bf16.mxu0 %v1229
    %1367 = vmatpush1.bf16.msra.mxu0 %v1228
    %1368 = vmatprep.subr.bf16.mxu0 %v1236
    %1369 = vmatpush1.bf16.msra.mxu0 %v1235
    %1370 = vmatprep.subr.bf16.mxu0 %v1243
    %1371 = vmatpush1.bf16.msra.mxu0 %v1242
    %1372 = vmatprep.subr.bf16.mxu0 %v1250
    %1373 = vmatpush1.bf16.msra.mxu0 %v1249
    %1374 = vmatprep.subr.bf16.mxu0 %v1257
    %1375 = vmatpush1.bf16.msra.mxu0 %v1256
    %1376 = vmatprep.subr.bf16.mxu0 0
    %1377 = vmatpush1.bf16.msra.mxu0 0
    %1378 = vmatprep.subr.bf16.mxu0 0
    %1379 = vmatpush1.bf16.msra.mxu0 0
    %1380 = vmatprep.subr.bf16.mxu0 0
    %1381 = vmatpush1.bf16.msra.mxu0 0
    %1382 = vmatprep.subr.bf16.mxu0 0
    %1383 = vmatpush1.bf16.msra.mxu0 0
    %1384 = vmatprep.subr.bf16.mxu0 0
    %1385 = vmatpush1.bf16.msra.mxu0 0
    %1386 = vmatprep.subr.bf16.mxu0 0
    %1387 = vmatpush1.bf16.msra.mxu0 0
    %1388 = vmatprep.subr.bf16.mxu0 0
    %1389 = vmatpush1.bf16.msra.mxu0 0
    %1390 = vmatprep.subr.bf16.mxu0 0
    %1391 = vmatpush1.bf16.msra.mxu0 0
    %1392 = vmatprep.mubr.bf16.mxu0 0
    %1393 = vmatmul.mubr.bf16.gmra.mrb[0].mxu0 %v927
    %v1394 = vpop.f32.mrb[0].mxu0
    %v1395 = vadd.f32 %v1005, %v1394
    %v1396 = vpop.f32.mrb[0].mxu0
    %v1397 = vadd.f32 %v1009, %v1396
    %v1398 = vpop.f32.mrb[0].mxu0
    %v1399 = vadd.f32 %v1005, %v1398
    %v1400 = vpop.f32.mrb[0].mxu0
    %v1401 = vadd.f32 %v1009, %v1400
    %1402 = vdwg.mxu0
    %1403 = vmatprep.subr.bf16.mxu0 %v1210
    %1404 = vmatpush1.bf16.msra.mxu0 %v1209
    %1405 = vmatprep.subr.bf16.mxu0 %v1217
    %1406 = vmatpush1.bf16.msra.mxu0 %v1216
    %1407 = vmatprep.subr.bf16.mxu0 %v1224
    %1408 = vmatpush1.bf16.msra.mxu0 %v1223
    %1409 = vmatprep.subr.bf16.mxu0 %v1231
    %1410 = vmatpush1.bf16.msra.mxu0 %v1230
    %1411 = vmatprep.subr.bf16.mxu0 %v1238
    %1412 = vmatpush1.bf16.msra.mxu0 %v1237
    %1413 = vmatprep.subr.bf16.mxu0 %v1245
    %1414 = vmatpush1.bf16.msra.mxu0 %v1244
    %1415 = vmatprep.subr.bf16.mxu0 %v1252
    %1416 = vmatpush1.bf16.msra.mxu0 %v1251
    %1417 = vmatprep.subr.bf16.mxu0 %v1259
    %1418 = vmatpush1.bf16.msra.mxu0 %v1258
    %1419 = vmatprep.subr.bf16.mxu0 0
    %1420 = vmatpush1.bf16.msra.mxu0 0
    %1421 = vmatprep.subr.bf16.mxu0 0
    %1422 = vmatpush1.bf16.msra.mxu0 0
    %1423 = vmatprep.subr.bf16.mxu0 0
    %1424 = vmatpush1.bf16.msra.mxu0 0
    %1425 = vmatprep.subr.bf16.mxu0 0
    %1426 = vmatpush1.bf16.msra.mxu0 0
    %1427 = vmatprep.subr.bf16.mxu0 0
    %1428 = vmatpush1.bf16.msra.mxu0 0
    %1429 = vmatprep.subr.bf16.mxu0 0
    %1430 = vmatpush1.bf16.msra.mxu0 0
    %1431 = vmatprep.subr.bf16.mxu0 0
    %1432 = vmatpush1.bf16.msra.mxu0 0
    %1433 = vmatprep.subr.bf16.mxu0 0
    %1434 = vmatpush1.bf16.msra.mxu0 0
    %1435 = vmatprep.mubr.bf16.mxu0 0
    %1436 = vmatmul.mubr.bf16.gmra.mrb[0].mxu0 %v927
    %v1437 = vpop.f32.mrb[0].mxu0
    %v1438 = vadd.f32 %v1013, %v1437
    %v1439 = vpop.f32.mrb[0].mxu0
    %v1440 = vadd.f32 %v1017, %v1439
    %v1441 = vpop.f32.mrb[0].mxu0
    %v1442 = vadd.f32 %v1013, %v1441
    %v1443 = vpop.f32.mrb[0].mxu0
    %v1444 = vadd.f32 %v1017, %v1443
    %1445 = vdwg.mxu0
    %1446 = vmatprep.subr.bf16.mxu0 0
    %1447 = vmatpush1.bf16.msra.mxu0 %v1211
    %1448 = vmatprep.subr.bf16.mxu0 0
    %1449 = vmatpush1.bf16.msra.mxu0 %v1218
    %1450 = vmatprep.subr.bf16.mxu0 0
    %1451 = vmatpush1.bf16.msra.mxu0 %v1225
    %1452 = vmatprep.subr.bf16.mxu0 0
    %1453 = vmatpush1.bf16.msra.mxu0 %v1232
    %1454 = vmatprep.subr.bf16.mxu0 0
    %1455 = vmatpush1.bf16.msra.mxu0 %v1239
    %1456 = vmatprep.subr.bf16.mxu0 0
    %1457 = vmatpush1.bf16.msra.mxu0 %v1246
    %1458 = vmatprep.subr.bf16.mxu0 0
    %1459 = vmatpush1.bf16.msra.mxu0 %v1253
    %1460 = vmatprep.subr.bf16.mxu0 0
    %1461 = vmatpush1.bf16.msra.mxu0 %v1260
    %1462 = vmatprep.subr.bf16.mxu0 0
    %1463 = vmatpush1.bf16.msra.mxu0 0
    %1464 = vmatprep.subr.bf16.mxu0 0
    %1465 = vmatpush1.bf16.msra.mxu0 0
    %1466 = vmatprep.subr.bf16.mxu0 0
    %1467 = vmatpush1.bf16.msra.mxu0 0
    %1468 = vmatprep.subr.bf16.mxu0 0
    %1469 = vmatpush1.bf16.msra.mxu0 0
    %1470 = vmatprep.subr.bf16.mxu0 0
    %1471 = vmatpush1.bf16.msra.mxu0 0
    %1472 = vmatprep.subr.bf16.mxu0 0
    %1473 = vmatpush1.bf16.msra.mxu0 0
    %1474 = vmatprep.subr.bf16.mxu0 0
    %1475 = vmatpush1.bf16.msra.mxu0 0
    %1476 = vmatprep.subr.bf16.mxu0 0
    %1477 = vmatpush1.bf16.msra.mxu0 0
    %1478 = vmatprep.mubr.bf16.mxu0 0
    %1479 = vmatmul.mubr.bf16.gmra.mrb[0].mxu0 %v927
    %v1480 = vpop.f32.mrb[0].mxu0
    %v1481 = vadd.f32 %v1021, %v1480
    %v1482 = vpop.f32.mrb[0].mxu0
    %v1483 = vpop.f32.mrb[0].mxu0
    %v1484 = vadd.f32 %v1021, %v1483
    %v1485 = vpop.f32.mrb[0].mxu0
    %1486 = vdwg.mxu0
    %1487 = vst [vmem:[#allocation2] sm:$0xff] %v1352
    %1488 = vst [vmem:[#allocation2 + $0x8] sm:$0xff] %v1354
    %1489 = vst [vmem:[#allocation2 + $0x10] sm:$0xff] %v1395
    %1490 = vst [vmem:[#allocation2 + $0x18] sm:$0xff] %v1397
    %1491 = vst [vmem:[#allocation2 + $0x20] sm:$0xff] %v1438
    %1492 = vst [vmem:[#allocation2 + $0x28] sm:$0xff] %v1440
    %1493 = vst [vmem:[#allocation2 + $0x30] sm:$0xff] %v1481
    %1494 = vst [vmem:[#allocation2 + $0x38] sm:$0xff] %v1356
    %1495 = vst [vmem:[#allocation2 + $0x40] sm:$0xff] %v1358
    %1496 = vst [vmem:[#allocation2 + $0x48] sm:$0xff] %v1399
    %1497 = vst [vmem:[#allocation2 + $0x50] sm:$0xff] %v1401
    %1498 = vst [vmem:[#allocation2 + $0x58] sm:$0xff] %v1442
    %1499 = vst [vmem:[#allocation2 + $0x60] sm:$0xff] %v1444
    %1500 = vst [vmem:[#allocation2 + $0x68] sm:$0xff] %v1484
    // Predicated region
    $region38: #{autoencoder_forward.1} parent=1 // pred_check
      _
    $region39: #{autoencoder_forward.1} parent=1 // pred_check_branch
      %1502 = sbr.rel (0) target = $region41
    $region40: #{autoencoder_forward.1} parent=1 // pred_region
      %s1504 = ssub.s32 1792, 1792
      %1505 = vsyncadd [#allocation3], %s1504
      %s1506 = sshll.u32 [#allocation2], 4
      %s1507 = int_to_ptr.vmem [resolvable:$true] %s1506
      %1512 = dma.vmem_to_hbm [thread:$0]  %s1507, 1792, %s9, [#allocation3], 896, 896, 56
    $region41: #{autoencoder_forward.1} parent=1 // pred_fallthru
      _
    // Predicated region
    $region42: #{autoencoder_forward.1} parent=1 // pred_check
      _
    $region43: #{autoencoder_forward.1} parent=1 // pred_check_branch
      %1514 = sbr.rel (0) target = $region45
    $region44: #{autoencoder_forward.1} parent=1 // pred_region
      %1515 = dma.done [#allocation3], 1792
    $region45: #{autoencoder_forward.1} parent=1 // pred_fallthru
      _
    %1516 = vsyncpa [#allocation3], 1

</llo_original>
